<compile_context>
chip_gen: v6e
topology: v6e:2x2x1
jax: 0.10.0
libtpu: 0.0.40
codegen_flags: <defaults>
</compile_context>

<pallas_src>
import functools

import jax
import jax.numpy as jnp
from jax.experimental import pallas as pl
from jax.experimental.pallas import tpu as pltpu


def _round_up(x, m):
    return ((x + m - 1) // m) * m


# ---------------------------------------------------------------------------
# One-time (eager) feature / hardware probes.
# ---------------------------------------------------------------------------
@functools.lru_cache(maxsize=None)
def _buffered_supported():
    """True iff pl.BlockSpec(..., pipeline_mode=pl.Buffered(k)) compiles & runs."""
    if not hasattr(pl, "Buffered"):
        return False

    def _copy_kernel(x_ref, o_ref):
        o_ref[...] = x_ref[...]

    try:
        spec = pl.BlockSpec((8, 128), lambda i: (0, 0),
                            pipeline_mode=pl.Buffered(1))
        fn = pl.pallas_call(
            _copy_kernel,
            out_shape=jax.ShapeDtypeStruct((8, 128), jnp.float32),
            grid=(1,),
            in_specs=[spec],
            out_specs=pl.BlockSpec((8, 128), lambda i: (0, 0)),
        )
        jax.block_until_ready(fn(jnp.zeros((8, 128), jnp.float32)))
        return True
    except Exception:
        return False


@functools.lru_cache(maxsize=None)
def _vmem_capacity_bytes():
    """Physical per-core VMEM (128 MiB v5e/v6e, 64 MiB v7x); conservative fallback."""
    try:
        info = pltpu.get_tpu_info()
        for name in ("vmem_capacity_bytes", "vmem_bytes", "vmem_size_bytes"):
            v = getattr(info, name, None)
            if v:
                return int(v)
    except Exception:
        pass
    return 64 << 20  # smallest per-core VMEM across v5e/v6e/v7x


# ---------------------------------------------------------------------------
# Kernels.
# ---------------------------------------------------------------------------
def _resident_kernel(x_ref, w1_ref, b1_ref, w2_ref, b2_ref, o_ref):
    # out = (x @ W1 + b1) @ W2 + b2, both weights VMEM-resident.
    # h stays in f32 registers; cast to the MXU dtype only for the 2nd matmul.
    h = jnp.dot(x_ref[...], w1_ref[...], preferred_element_type=jnp.float32)
    h = h + b1_ref[...]
    y = jnp.dot(h.astype(w2_ref.dtype), w2_ref[...],
                preferred_element_type=jnp.float32)
    o_ref[...] = (y + b2_ref[...]).astype(o_ref.dtype)


def _tiled_kernel(x_ref, w1_ref, b1_ref, w2_ref, b2_ref, o_ref, h_ref):
    # h (f32 scratch) computed once per row tile at j == 0, reused across
    # the streamed W2 column tiles.  (x is only read at j == 0.)
    @pl.when(pl.program_id(1) == 0)
    def _():
        h = jnp.dot(x_ref[...], w1_ref[...], preferred_element_type=jnp.float32)
        h_ref[...] = h + b1_ref[...]

    y = jnp.dot(h_ref[...].astype(w2_ref.dtype), w2_ref[...],
                preferred_element_type=jnp.float32)
    o_ref[...] = (y + b2_ref[...]).astype(o_ref.dtype)


# ---------------------------------------------------------------------------
# Planner: pick kernel variant + tile sizes from a generation-specific VMEM budget.
# ---------------------------------------------------------------------------
def _plan(m, k1p, dp, compute_dtype, out_dtype, tile_m_target=1024,
          tile_n_target=512):
    cb = jnp.dtype(compute_dtype).itemsize
    ob = jnp.dtype(out_dtype).itemsize
    cap = _vmem_capacity_bytes()
    budget = max(cap - (12 << 20), 16 << 20)          # leave compiler headroom
    use_buffered = _buffered_supported()
    wbuf = 1 if use_buffered else 2                   # buffers for constant-index blocks

    # Sub-32-bit dtypes pack rows per sublane: f32->8, bf16->16, int8/fp8->32.
    row_align = max(8, 32 // cb)

    # Big row tiles amortize W2 streaming in the fallback path, but cap at ~m/2
    # so the "parallel" M axis has >= 2 blocks for v7x's two TensorCores.
    m_r = _round_up(m, row_align)
    tm_max = min(_round_up(tile_m_target, row_align), m_r)
    if m_r >= 2 * row_align:
        tm_max = min(tm_max, _round_up(-(-m // 2), row_align))
    tm_max = max(row_align, (tm_max // row_align) * row_align)

    def shrink(tm):
        return max(row_align, ((tm // 2) // row_align) * row_align)

    def resident_vmem(tm):
        return (2 * tm * k1p * cb            # x tiles (double-buffered)
                + wbuf * k1p * dp * cb       # W1 resident
                + wbuf * dp * dp * cb        # W2 resident
                + 2 * wbuf * 8 * dp * 4     # biases (sublane-padded, f32)
                + 2 * tm * dp * ob           # out tiles
                + tm * dp * 4)               # f32 intermediate h

    def tiled_vmem(tm, tn):
        return (2 * tm * k1p * cb            # x tiles
                + wbuf * k1p * dp * cb       # W1 resident
                + wbuf * 8 * dp * 4          # b1
                + 3 * dp * tn * cb           # W2 column tiles (Buffered(3))
                + 3 * 8 * tn * 4             # b2 tiles
                + 2 * tm * tn * ob           # out tiles
                + tm * dp * 4)               # f32 h scratch

    def finish(path, tm, tn, needed):
        vmem_limit = int(min(cap - (4 << 20),
                             max(needed * 5 // 4 + (2 << 20), 16 << 20)))
        return dict(path=path, tm=int(tm), tn=int(tn),
                    use_buffered=bool(use_buffered), vmem_limit=vmem_limit)

    # 1) Prefer both weights resident (single HBM pass over W1 and W2).
    tm = tm_max
    while True:
        need = resident_vmem(tm)
        if need <= budget:
            return finish("resident", tm, dp, need)
        if tm <= row_align:
            break
        tm = shrink(tm)

    # 2) Fallback: stream W2 column tiles over a second grid axis.
    tn_candidates = tuple(t for t in (512, 256, 128) if t <= max(tile_n_target, 128))
    tm = tm_max
    while True:
        for tn in tn_candidates:
            if tn > dp or dp % tn:
                continue
            need = tiled_vmem(tm, tn)
            if need <= budget:
                return finish("tiled", tm, tn, need)
        if tm <= row_align:
            break
        tm = shrink(tm)

    # 3) Last resort: smallest tiles; let Mosaic spill if it must.
    return finish("tiled", row_align, 128, tiled_vmem(row_align, 128))


# ---------------------------------------------------------------------------
# Forward pass.
# ---------------------------------------------------------------------------
@functools.partial(
    jax.jit,
    static_argnames=("model_dim", "path", "tm", "tn", "use_buffered", "vmem_limit"))
def _forward_impl(src, w1p, b1p, w2p, b2p, *, model_dim, path, tm, tn,
                  use_buffered, vmem_limit):
    seq, batch, input_dim = src.shape
    k1p, dp = w1p.shape
    compute_dtype = w1p.dtype
    out_dtype = src.dtype
    cb = jnp.dtype(compute_dtype).itemsize
    ob = jnp.dtype(out_dtype).itemsize

    m = seq * batch
    m_pad = _round_up(m, tm)
    n_m = m_pad // tm

    x2d = src.reshape(m, input_dim)
    x2d = jnp.pad(x2d, ((0, m_pad - m), (0, k1p - input_dim))).astype(compute_dtype)

    def w_spec(shape, index_map, buffers):
        if use_buffered:
            return pl.BlockSpec(shape, index_map, pipeline_mode=pl.Buffered(buffers))
        return pl.BlockSpec(shape, index_map)

    flops = 2 * m_pad * dp * (k1p + dp)

    if path == "resident":
        bytes_accessed = (m_pad * k1p * cb + k1p * dp * cb + dp * dp * cb
                          + 2 * dp * 4 + m_pad * dp * ob)
        out = pl.pallas_call(
            _resident_kernel,
            out_shape=jax.ShapeDtypeStruct((m_pad, dp), out_dtype),
            grid_spec=pltpu.PrefetchScalarGridSpec(
                num_scalar_prefetch=0,
                grid=(n_m,),
                in_specs=[
                    pl.BlockSpec((tm, k1p), lambda i: (i, 0)),   # x row tiles
                    w_spec((k1p, dp), lambda i: (0, 0), 1),      # W1 (resident)
                    w_spec((1, dp), lambda i: (0, 0), 1),        # b1
                    w_spec((dp, dp), lambda i: (0, 0), 1),       # W2 (resident)
                    w_spec((1, dp), lambda i: (0, 0), 1),        # b2
                ],
                out_specs=pl.BlockSpec((tm, dp), lambda i: (i, 0)),
            ),
            compiler_params=pltpu.CompilerParams(
                dimension_semantics=("parallel",),
                vmem_limit_bytes=vmem_limit),
            cost_estimate=pl.CostEstimate(flops=flops, transcendentals=0,
                                          bytes_accessed=bytes_accessed),
        )(x2d, w1p, b1p, w2p, b2p)
    else:
        # W2/b2 re-streamed once per row tile -> reflect it in the estimate.
        bytes_accessed = (m_pad * k1p * cb + k1p * dp * cb
                          + n_m * (dp * dp * cb + dp * 4)
                          + dp * 4 + m_pad * dp * ob)
        out = pl.pallas_call(
            _tiled_kernel,
            out_shape=jax.ShapeDtypeStruct((m_pad, dp), out_dtype),
            grid_spec=pltpu.PrefetchScalarGridSpec(
                num_scalar_prefetch=0,
                grid=(n_m, dp // tn),
                in_specs=[
                    pl.BlockSpec((tm, k1p), lambda i, j: (i, 0)),  # x (read at j==0)
                    w_spec((k1p, dp), lambda i, j: (0, 0), 1),     # W1 (resident)
                    w_spec((1, dp), lambda i, j: (0, 0), 1),       # b1
                    w_spec((dp, tn), lambda i, j: (0, j), 3),      # W2 column tiles
                    w_spec((1, tn), lambda i, j: (0, j), 3),       # b2 column tiles
                ],
                out_specs=pl.BlockSpec((tm, tn), lambda i, j: (i, j)),
                scratch_shapes=[pltpu.VMEM((tm, dp), jnp.float32)],  # f32 h
            ),
            compiler_params=pltpu.CompilerParams(
                dimension_semantics=("parallel", "arbitrary"),
                vmem_limit_bytes=vmem_limit),
            cost_estimate=pl.CostEstimate(flops=flops, transcendentals=0,
                                          bytes_accessed=bytes_accessed),
        )(x2d, w1p, b1p, w2p, b2p)

    return out[:m, :model_dim].reshape(seq, batch, model_dim)


def prepare_params(params, compute_dtype=jnp.bfloat16):
    """Pad feature dims to lane-dense multiples and cast weights ONCE (cached)."""
    # Warm the eager probes so planning inside any outer trace stays cheap.
    _buffered_supported()
    _vmem_capacity_bytes()

    w1, b1, w2, b2 = params["w1"], params["b1"], params["w2"], params["b2"]
    input_dim, model_dim = w1.shape
    k1p = _round_up(input_dim, 128)
    dp = _round_up(model_dim, 128)
    if dp > 128:
        # Multiple of 256 keeps the 256-wide MXU fully occupied and guarantees
        # the streamed N tile is 256/512, never 128.
        dp = _round_up(model_dim, 256)

    w1p = jnp.pad(w1, ((0, k1p - input_dim), (0, dp - model_dim))).astype(compute_dtype)
    w2p = jnp.pad(w2, ((0, dp - model_dim), (0, dp - model_dim))).astype(compute_dtype)
    b1p = jnp.pad(b1, ((0, 0), (0, dp - model_dim))).astype(jnp.float32)
    b2p = jnp.pad(b2, ((0, 0), (0, dp - model_dim))).astype(jnp.float32)
    return {"w1": w1p, "b1": b1p, "w2": w2p, "b2": b2p, "model_dim": int(model_dim)}


def transformer_encoder_forward(src, prepared, *, tile_m=1024, tile_n=512):
    """src: (seq, batch, input_dim) -> (seq, batch, model_dim)."""
    seq, batch, _ = src.shape
    w1p = prepared["w1"]
    k1p, dp = w1p.shape
    plan = _plan(seq * batch, k1p, dp, compute_dtype=w1p.dtype,
                 out_dtype=src.dtype, tile_m_target=tile_m, tile_n_target=tile_n)
    return _forward_impl(src, prepared["w1"], prepared["b1"],
                         prepared["w2"], prepared["b2"],
                         model_dim=prepared["model_dim"], **plan)


def init_params(key, input_dim, model_dim):
    """Mimics nn.Linear default init (uniform +/- 1/sqrt(fan_in)); weights are
    stored pre-transposed as (in, out) so the kernel does x @ W."""
    k1, k2, k3, k4 = jax.random.split(key, 4)
    bound1 = 1.0 / (input_dim ** 0.5)
    bound2 = 1.0 / (model_dim ** 0.5)
    w1 = jax.random.uniform(k1, (input_dim, model_dim), jnp.float32, -bound1, bound1)
    b1 = jax.random.uniform(k2, (1, model_dim), jnp.float32, -bound1, bound1)
    w2 = jax.random.uniform(k3, (model_dim, model_dim), jnp.float32, -bound2, bound2)
    b2 = jax.random.uniform(k4, (1, model_dim), jnp.float32, -bound2, bound2)
    return {"w1": w1, "b1": b1, "w2": w2, "b2": b2}


if __name__ == "__main__":
    # NOTE: the PyTorch module builds an nn.TransformerEncoderLayer (and dropout)
    # in __init__ but never uses them in forward(); the forward pass is exactly
    # output_linear(input_linear(src)), which is what this kernel implements.
    seq, batch, input_dim, model_dim = 8, 2, 16, 32

    key = jax.random.PRNGKey(0)
    k_x, k_p = jax.random.split(key)
    src = jax.random.normal(k_x, (seq, batch, input_dim), dtype=jnp.float32)
    params = init_params(k_p, input_dim, model_dim)

    # Plain-JAX reference.
    ref = (src.reshape(-1, input_dim) @ params["w1"] + params["b1"]) @ params["w2"] + params["b2"]
    ref = ref.reshape(seq, batch, model_dim)

    # Default bf16 MXU path (fast on v6e/v7x): f32 accumulation, f32 h, loose tol.
    prepared_bf16 = prepare_params(params)                      # default bf16
    out_bf16 = jax.block_until_ready(transformer_encoder_forward(src, prepared_bf16))
    assert out_bf16.shape == (seq, batch, model_dim)
    assert jnp.allclose(out_bf16, ref, atol=1.5e-1, rtol=1e-1)

    # f32 path (exact).
    prepared_f32 = prepare_params(params, compute_dtype=jnp.float32)
    out_f32 = jax.block_until_ready(transformer_encoder_forward(src, prepared_f32))
    assert out_f32.shape == (seq, batch, model_dim)
    assert jnp.allclose(out_f32, ref, atol=1e-5, rtol=1e-5)

    print("KERNEL_OK")
</pallas_src>

<mosaic_0001>
module attributes {stable_mosaic.version = 11 : i64} {
  func.func @_copy_kernel(%arg0: i32, %arg1: memref<8x128xf32, #tpu.memory_space<vmem>>, %arg2: memref<8x128xf32, #tpu.memory_space<vmem>>) attributes {dimension_semantics = [#tpu.dimension_semantics<arbitrary>], iteration_bounds = array<i64: 1>, scalar_prefetch = 0 : i64, scratch_operands = 0 : i64, tpu.core_type = #tpu.core_type<tc>, window_params = [{pipeline_mode = #tpu.pipeline_mode<synchronous>, transform_indices = @transform_0, window_bounds = array<i64: 8, 128>}, {pipeline_mode = #tpu.pipeline_mode<synchronous>, transform_indices = @transform_1, window_bounds = array<i64: 8, 128>}]} {
    %c0 = arith.constant 0 : index
    %c0_0 = arith.constant 0 : index
    %0 = vector.load %arg1[%c0, %c0_0] : memref<8x128xf32, #tpu.memory_space<vmem>>, vector<8x128xf32>
    %c0_1 = arith.constant 0 : index
    %c0_2 = arith.constant 0 : index
    %1 = vector.load %arg2[%c0_1, %c0_2] : memref<8x128xf32, #tpu.memory_space<vmem>>, vector<8x128xf32>
    tpu.vector_store %arg2[%c0_1, %c0_2], %0 {strides = array<i32>} : memref<8x128xf32, #tpu.memory_space<vmem>>, vector<8x128xf32>,
    return
  }
  func.func @transform_0(%arg0: i32) -> (i32, i32) {
    %c0_i32 = arith.constant 0 : i32
    %c0_i32_0 = arith.constant 0 : i32
    %c0_i32_1 = arith.constant 0 : i32
    return %c0_i32, %c0_i32_0 : i32, i32
  }
  func.func @transform_1(%arg0: i32) -> (i32, i32) {
    %c0_i32 = arith.constant 0 : i32
    %c0_i32_0 = arith.constant 0 : i32
    %c0_i32_1 = arith.constant 0 : i32
    return %c0_i32, %c0_i32_0 : i32, i32
  }
}

module attributes {stable_mosaic.version = 11 : i64} {
  func.func @_resident_kernel(%arg0: i32, %arg1: memref<16x128xbf16, #tpu.memory_space<vmem>>, %arg2: memref<128x128xbf16, #tpu.memory_space<vmem>>, %arg3: memref<1x128xf32, #tpu.memory_space<vmem>>, %arg4: memref<128x128xbf16, #tpu.memory_space<vmem>>, %arg5: memref<1x128xf32, #tpu.memory_space<vmem>>, %arg6: memref<16x128xf32, #tpu.memory_space<vmem>>) attributes {dimension_semantics = [#tpu.dimension_semantics<parallel>], iteration_bounds = array<i64: 1>, scalar_prefetch = 0 : i64, scratch_operands = 0 : i64, tpu.core_type = #tpu.core_type<tc>, window_params = [{transform_indices = @transform_0, window_bounds = array<i64: 16, 128>}, {pipeline_mode = #tpu.pipeline_mode<synchronous>, transform_indices = @transform_1, window_bounds = array<i64: 128, 128>}, {pipeline_mode = #tpu.pipeline_mode<synchronous>, transform_indices = @transform_2, window_bounds = array<i64: 1, 128>}, {pipeline_mode = #tpu.pipeline_mode<synchronous>, transform_indices = @transform_3, window_bounds = array<i64: 128, 128>}, {pipeline_mode = #tpu.pipeline_mode<synchronous>, transform_indices = @transform_4, window_bounds = array<i64: 1, 128>}, {transform_indices = @transform_5, window_bounds = array<i64: 16, 128>}]} {
    %c0 = arith.constant 0 : index
    %c0_0 = arith.constant 0 : index
    %0 = vector.load %arg1[%c0, %c0_0] : memref<16x128xbf16, #tpu.memory_space<vmem>>, vector<16x128xbf16>
    %c0_1 = arith.constant 0 : index
    %c0_2 = arith.constant 0 : index
    %1 = vector.load %arg2[%c0_1, %c0_2] : memref<128x128xbf16, #tpu.memory_space<vmem>>, vector<128x128xbf16>
    %cst = arith.constant dense<0.000000e+00> : vector<16x128xf32>
    %2 = tpu.matmul %0, %1, %cst {dimension_numbers = #tpu.dot_dimension_numbers<[1], [0], [0], [1], [0, 0, 1, 1], [], []>} : vector<16x128xbf16>, vector<128x128xbf16>, vector<16x128xf32> -> vector<16x128xf32>
    %c0_3 = arith.constant 0 : index
    %c0_4 = arith.constant 0 : index
    %3 = vector.load %arg3[%c0_3, %c0_4] : memref<1x128xf32, #tpu.memory_space<vmem>>, vector<1x128xf32>
    %4 = vector.broadcast %3 : vector<1x128xf32> to vector<16x128xf32>
    %5 = arith.addf %2, %4 : vector<16x128xf32>
    %6 = arith.truncf %5 : vector<16x128xf32> to vector<16x128xbf16>
    %c0_5 = arith.constant 0 : index
    %c0_6 = arith.constant 0 : index
    %7 = vector.load %arg4[%c0_5, %c0_6] : memref<128x128xbf16, #tpu.memory_space<vmem>>, vector<128x128xbf16>
    %cst_7 = arith.constant dense<0.000000e+00> : vector<16x128xf32>
    %8 = tpu.matmul %6, %7, %cst_7 {dimension_numbers = #tpu.dot_dimension_numbers<[1], [0], [0], [1], [0, 0, 1, 1], [], []>} : vector<16x128xbf16>, vector<128x128xbf16>, vector<16x128xf32> -> vector<16x128xf32>
    %c0_8 = arith.constant 0 : index
    %c0_9 = arith.constant 0 : index
    %9 = vector.load %arg5[%c0_8, %c0_9] : memref<1x128xf32, #tpu.memory_space<vmem>>, vector<1x128xf32>
    %10 = vector.broadcast %9 : vector<1x128xf32> to vector<16x128xf32>
    %11 = arith.addf %8, %10 : vector<16x128xf32>
    %c0_10 = arith.constant 0 : index
    %c0_11 = arith.constant 0 : index
    %12 = vector.load %arg6[%c0_10, %c0_11] : memref<16x128xf32, #tpu.memory_space<vmem>>, vector<16x128xf32>
    tpu.vector_store %arg6[%c0_10, %c0_11], %11 {strides = array<i32>} : memref<16x128xf32, #tpu.memory_space<vmem>>, vector<16x128xf32>,
    return
  }
  func.func @transform_0(%arg0: i32) -> (i32, i32) {
    %c0_i32 = arith.constant 0 : i32
    %c0_i32_0 = arith.constant 0 : i32
    return %arg0, %c0_i32 : i32, i32
  }
  func.func @transform_1(%arg0: i32) -> (i32, i32) {
    %c0_i32 = arith.constant 0 : i32
    %c0_i32_0 = arith.constant 0 : i32
    %c0_i32_1 = arith.constant 0 : i32
    return %c0_i32, %c0_i32_0 : i32, i32
  }
  func.func @transform_2(%arg0: i32) -> (i32, i32) {
    %c0_i32 = arith.constant 0 : i32
    %c0_i32_0 = arith.constant 0 : i32
    %c0_i32_1 = arith.constant 0 : i32
    return %c0_i32, %c0_i32_0 : i32, i32
  }
  func.func @transform_3(%arg0: i32) -> (i32, i32) {
    %c0_i32 = arith.constant 0 : i32
    %c0_i32_0 = arith.constant 0 : i32
    %c0_i32_1 = arith.constant 0 : i32
    return %c0_i32, %c0_i32_0 : i32, i32
  }
  func.func @transform_4(%arg0: i32) -> (i32, i32) {
    %c0_i32 = arith.constant 0 : i32
    %c0_i32_0 = arith.constant 0 : i32
    %c0_i32_1 = arith.constant 0 : i32
    return %c0_i32, %c0_i32_0 : i32, i32
  }
  func.func @transform_5(%arg0: i32) -> (i32, i32) {
    %c0_i32 = arith.constant 0 : i32
    %c0_i32_0 = arith.constant 0 : i32
    return %arg0, %c0_i32 : i32, i32
  }
}

</mosaic_0001>

<llo_original>
// kernel: tpu_custom_call.1
$region0: #{tpu_custom_call.1}
  #allocation0 [shape = 'u32[]', space=smem, size = 0x4, offset = 0x4, fixed_abs, tag = 'smem constant byte address 0x4 - core index']
  #allocation1 [shape = 'u32[144,128]{1,0:T(1,128)}', space=vmem, size = 0x12000, scoped, tag = 'internal scratch']
  %s0 = inlined_call_operand.hbm [shape: f32[8,128], index: 0, kind: input, shape index: {}]
  %s1 = inlined_call_operand.hbm [shape: f32[8,128], index: 1, kind: output, shape index: {}]
  %s2 = sld [smem:[#allocation0]]
  $region18: #{tpu_custom_call.1} parent=0
    _
  %s4 = ssub.s32 1, %s2
  %s5 = scalar_select 0, %s4, %s2
  $region1: #{tpu_custom_call.1} parent=0
    #allocation2 [shape = 'u8[4096]{0}', space=vmem, size = 0x1000, scoped, tag = 'input window, operand 0, single buffered']
    #allocation3 [shape = 's32[1]{0}', space=sflag, size = 0x4, scoped, tag = 'scoped memory for tpu_custom_call.1']
    #allocation4 [shape = 's32[1]{0}', space=sflag, size = 0x4, scoped, tag = 'scoped memory for tpu_custom_call.1']
    #allocation5 [shape = 'u8[4096]{0}', space=vmem, size = 0x1000, scoped, tag = 'output window, operand 0, single buffered']
    %6 = vsyncpa [#allocation3], 0
    %7 = vsyncpa [#allocation4], 0
    // Predicated region
    $region2: #{tpu_custom_call.1} parent=1 // pred_check
      _
    $region3: #{tpu_custom_call.1} parent=1 // pred_check_branch
      %9 = sbr.rel (0) target = $region5
    $region4: #{tpu_custom_call.1} parent=1 // pred_region
      %s11 = ssub.s32 128, 128
      %12 = vsyncadd [#allocation3], %s11
      %s14 = sshll.u32 [#allocation2], 4
      %s15 = int_to_ptr.vmem [resolvable:$true] %s14
      %17 = dma.hbm_to_vmem [thread:$0]  %s0, 128, %s15, [#allocation3]
    $region5: #{tpu_custom_call.1} parent=1 // pred_fallthru
      _
    // Predicated region
    $region6: #{tpu_custom_call.1} parent=1 // pred_check
      _
    $region7: #{tpu_custom_call.1} parent=1 // pred_check_branch
      %19 = sbr.rel (0) target = $region9
    $region8: #{tpu_custom_call.1} parent=1 // pred_region
      %20 = dma.done [#allocation3], 128
    $region9: #{tpu_custom_call.1} parent=1 // pred_fallthru
      _
    %v21 = vld [vmem:[#allocation2] sm:$0xff]
    %22 = vst [vmem:[#allocation5] sm:$0xff] %v21
    // Predicated region
    $region10: #{tpu_custom_call.1} parent=1 // pred_check
      _
    $region11: #{tpu_custom_call.1} parent=1 // pred_check_branch
      %24 = sbr.rel (0) target = $region13
    $region12: #{tpu_custom_call.1} parent=1 // pred_region
      %s26 = ssub.s32 128, 128
      %27 = vsyncadd [#allocation4], %s26
      %s29 = sshll.u32 [#allocation5], 4
      %s30 = int_to_ptr.vmem [resolvable:$true] %s29
      %32 = dma.vmem_to_hbm [thread:$0]  %s30, 128, %s1, [#allocation4]
    $region13: #{tpu_custom_call.1} parent=1 // pred_fallthru
      _
    // Predicated region
    $region14: #{tpu_custom_call.1} parent=1 // pred_check
      _
    $region15: #{tpu_custom_call.1} parent=1 // pred_check_branch
      %34 = sbr.rel (0) target = $region17
    $region16: #{tpu_custom_call.1} parent=1 // pred_region
      %35 = dma.done [#allocation4], 128
    $region17: #{tpu_custom_call.1} parent=1 // pred_fallthru
      _
    %36 = vsyncpa [#allocation3], 1
    %37 = vsyncpa [#allocation4], 1

// kernel: _forward_impl.1
$region0: #{_forward_impl.1}
  #allocation0 [shape = 'u32[]', space=smem, size = 0x4, offset = 0x4, fixed_abs, tag = 'smem constant byte address 0x4 - core index']
  #allocation1 [shape = 'u32[144,128]{1,0:T(1,128)}', space=vmem, size = 0x12000, scoped, tag = 'internal scratch']
  %s0 = inlined_call_operand.vmem [shape: bf16[16,128], index: 0, kind: input, shape index: {}]
  %s1 = inlined_call_operand.hbm [shape: bf16[128,128], index: 1, kind: input, shape index: {}]
  %s2 = inlined_call_operand.vmem [shape: f32[1,128], index: 2, kind: input, shape index: {}]
  %s3 = inlined_call_operand.hbm [shape: bf16[128,128], index: 3, kind: input, shape index: {}]
  %s4 = inlined_call_operand.vmem [shape: f32[1,128], index: 4, kind: input, shape index: {}]
  %s5 = inlined_call_operand.hbm [shape: f32[16,128], index: 5, kind: output, shape index: {}]
  %s6 = sld [smem:[#allocation0]]
  $region38: #{_forward_impl.1} parent=0
    _
  %s8 = ssub.s32 1, %s6
  %s9 = scalar_select 0, %s8, %s6
  $region1: #{_forward_impl.1} parent=0
    #allocation2 [shape = 'u8[32768]{0}', space=vmem, size = 0x8000, scoped, tag = 'input window, operand 1, single buffered']
    #allocation3 [shape = 's32[1]{0}', space=sflag, size = 0x4, scoped, tag = 'scoped memory for _forward_impl.1']
    #allocation4 [shape = 's32[1]{0}', space=sflag, size = 0x4, scoped, tag = 'scoped memory for _forward_impl.1']
    #allocation5 [shape = 'u8[32768]{0}', space=vmem, size = 0x8000, scoped, tag = 'input window, operand 3, single buffered']
    #allocation6 [shape = 's32[1]{0}', space=sflag, size = 0x4, scoped, tag = 'scoped memory for _forward_impl.1']
    #allocation7 [shape = 'u8[8192]{0}', space=vmem, size = 0x2000, scoped, tag = 'output window, operand 0, single buffered']
    %10 = vsyncpa [#allocation3], 0
    %11 = vsyncpa [#allocation6], 0
    %12 = vsyncpa [#allocation4], 0
    // Predicated region
    $region2: #{_forward_impl.1} parent=1 // pred_check
      _
    $region3: #{_forward_impl.1} parent=1 // pred_check_branch
      %14 = sbr.rel (0) target = $region5
    $region4: #{_forward_impl.1} parent=1 // pred_region
      _
    $region5: #{_forward_impl.1} parent=1 // pred_fallthru
      _
    // Predicated region
    $region6: #{_forward_impl.1} parent=1 // pred_check
      _
    $region7: #{_forward_impl.1} parent=1 // pred_check_branch
      %16 = sbr.rel (0) target = $region9
    $region8: #{_forward_impl.1} parent=1 // pred_region
      %s18 = ssub.s32 1024, 1024
      %19 = vsyncadd [#allocation3], %s18
      %s20 = sshll.u32 [#allocation2], 4
      %s21 = int_to_ptr.vmem [resolvable:$true] %s20
      %26 = dma.hbm_to_vmem [thread:$0]  %s1, 1024, %s21, [#allocation3], 64, 64, 4
    $region9: #{_forward_impl.1} parent=1 // pred_fallthru
      _
    // Predicated region
    $region10: #{_forward_impl.1} parent=1 // pred_check
      _
    $region11: #{_forward_impl.1} parent=1 // pred_check_branch
      %28 = sbr.rel (0) target = $region13
    $region12: #{_forward_impl.1} parent=1 // pred_region
      _
    $region13: #{_forward_impl.1} parent=1 // pred_fallthru
      _
    // Predicated region
    $region14: #{_forward_impl.1} parent=1 // pred_check
      _
    $region15: #{_forward_impl.1} parent=1 // pred_check_branch
      %30 = sbr.rel (0) target = $region17
    $region16: #{_forward_impl.1} parent=1 // pred_region
      %s32 = ssub.s32 1024, 1024
      %33 = vsyncadd [#allocation6], %s32
      %s34 = sshll.u32 [#allocation5], 4
      %s35 = int_to_ptr.vmem [resolvable:$true] %s34
      %40 = dma.hbm_to_vmem [thread:$0]  %s3, 1024, %s35, [#allocation6], 64, 64, 4
    $region17: #{_forward_impl.1} parent=1 // pred_fallthru
      _
    // Predicated region
    $region18: #{_forward_impl.1} parent=1 // pred_check
      _
    $region19: #{_forward_impl.1} parent=1 // pred_check_branch
      %42 = sbr.rel (0) target = $region21
    $region20: #{_forward_impl.1} parent=1 // pred_region
      _
    $region21: #{_forward_impl.1} parent=1 // pred_fallthru
      _
    // Predicated region
    $region22: #{_forward_impl.1} parent=1 // pred_check
      _
    $region23: #{_forward_impl.1} parent=1 // pred_check_branch
      %44 = sbr.rel (0) target = $region25
    $region24: #{_forward_impl.1} parent=1 // pred_region
      %45 = dma.done [#allocation3], 1024
    $region25: #{_forward_impl.1} parent=1 // pred_fallthru
      _
    // Predicated region
    $region26: #{_forward_impl.1} parent=1 // pred_check
      _
    $region27: #{_forward_impl.1} parent=1 // pred_check_branch
      %47 = sbr.rel (0) target = $region29
    $region28: #{_forward_impl.1} parent=1 // pred_region
      %48 = dma.done [#allocation6], 1024
    $region29: #{_forward_impl.1} parent=1 // pred_fallthru
      _
    %v50 = vld [vmem:[%s0] sm:$0xf]
    %v51 = vld [vmem:[%s0 + $0x4] sm:$0xf]
    %v52 = vld [vmem:[#allocation2] sm:$0xf]
    %v53 = vld [vmem:[#allocation2 + $0x4] sm:$0xf]
    %v54 = vld [vmem:[#allocation2 + $0x8] sm:$0xf]
    %v55 = vld [vmem:[#allocation2 + $0xc] sm:$0xf]
    %v56 = vld [vmem:[#allocation2 + $0x10] sm:$0xf]
    %v57 = vld [vmem:[#allocation2 + $0x14] sm:$0xf]
    %v58 = vld [vmem:[#allocation2 + $0x18] sm:$0xf]
    %v59 = vld [vmem:[#allocation2 + $0x1c] sm:$0xf]
    %v60 = vld [vmem:[#allocation2 + $0x20] sm:$0xf]
    %v61 = vld [vmem:[#allocation2 + $0x24] sm:$0xf]
    %v62 = vld [vmem:[#allocation2 + $0x28] sm:$0xf]
    %v63 = vld [vmem:[#allocation2 + $0x2c] sm:$0xf]
    %v64 = vld [vmem:[#allocation2 + $0x30] sm:$0xf]
    %v65 = vld [vmem:[#allocation2 + $0x34] sm:$0xf]
    %v66 = vld [vmem:[#allocation2 + $0x38] sm:$0xf]
    %v67 = vld [vmem:[#allocation2 + $0x3c] sm:$0xf]
    %v68 = vld [vmem:[%s2] sm:$0x1]
    %v70 = vlaneseq
    %v71 = vshrl.u32 %v70, 7
    %v72 = vsub.s32 0, %v71
    %v73 = vrot.slane %v68, %v72
    %v77 = vunpack.c.l.b16 %v50
    %v78 = vunpack.c.l.b16 %v51
    %v79 = vpack.c.b16 %v78, %v77
    %v97 = vunpack.c.l.b16 %v52
    %v98 = vunpack.c.l.b16 %v53
    %v99 = vunpack.c.l.b16 %v54
    %v100 = vunpack.c.l.b16 %v55
    %v101 = vunpack.c.l.b16 %v56
    %v102 = vunpack.c.l.b16 %v57
    %v103 = vunpack.c.l.b16 %v58
    %v104 = vunpack.c.l.b16 %v59
    %v105 = vunpack.c.l.b16 %v60
    %v106 = vunpack.c.l.b16 %v61
    %v107 = vunpack.c.l.b16 %v62
    %v108 = vunpack.c.l.b16 %v63
    %v109 = vunpack.c.l.b16 %v64
    %v110 = vunpack.c.l.b16 %v65
    %v111 = vunpack.c.l.b16 %v66
    %v112 = vunpack.c.l.b16 %v67
    %v113 = vpack.c.b16 %v98, %v97
    %v114 = vpack.c.b16 %v100, %v99
    %v115 = vpack.c.b16 %v102, %v101
    %v116 = vpack.c.b16 %v104, %v103
    %v117 = vpack.c.b16 %v106, %v105
    %v118 = vpack.c.b16 %v108, %v107
    %v119 = vpack.c.b16 %v110, %v109
    %v120 = vpack.c.b16 %v112, %v111
    %129 = vmatprep.subr.bf16.mxu0 0
    %130 = vmatpush1.bf16.msra.mxu0 %v120
    %131 = vmatprep.subr.bf16.mxu0 0
    %132 = vmatpush1.bf16.msra.mxu0 %v119
    %133 = vmatprep.subr.bf16.mxu0 0
    %134 = vmatpush1.bf16.msra.mxu0 %v118
    %135 = vmatprep.subr.bf16.mxu0 0
    %136 = vmatpush1.bf16.msra.mxu0 %v117
    %137 = vmatprep.subr.bf16.mxu0 0
    %138 = vmatpush1.bf16.msra.mxu0 %v116
    %139 = vmatprep.subr.bf16.mxu0 0
    %140 = vmatpush1.bf16.msra.mxu0 %v115
    %141 = vmatprep.subr.bf16.mxu0 0
    %142 = vmatpush1.bf16.msra.mxu0 %v114
    %143 = vmatprep.subr.bf16.mxu0 0
    %144 = vmatpush1.bf16.msra.mxu0 %v113
    %145 = vmatprep.subr.bf16.mxu0 0
    %146 = vmatpush2.bf16.msra.mxu0 0
    %147 = vmatprep.subr.bf16.mxu0 0
    %148 = vmatpush2.bf16.msra.mxu0 0
    %149 = vmatprep.subr.bf16.mxu0 0
    %150 = vmatpush2.bf16.msra.mxu0 0
    %151 = vmatprep.subr.bf16.mxu0 0
    %152 = vmatpush2.bf16.msra.mxu0 0
    %153 = vmatprep.subr.bf16.mxu0 0
    %154 = vmatpush2.bf16.msra.mxu0 0
    %155 = vmatprep.subr.bf16.mxu0 0
    %156 = vmatpush2.bf16.msra.mxu0 0
    %157 = vmatprep.subr.bf16.mxu0 0
    %158 = vmatpush2.bf16.msra.mxu0 0
    %159 = vmatprep.subr.bf16.mxu0 0
    %160 = vmatpush2.bf16.msra.mxu0 0
    %161 = vmatprep.mubr.bf16.mxu0 0
    %162 = vmatmul.mubr.bf16.gmra.mxu0 %v79
    %v163 = vpop.f32.mrf.mxu0
    %v164 = vadd.f32 %v73, %v163
    %v165 = vpop.f32.mrf.mxu0
    %v166 = vpop.f32.mrf.mxu0
    %v167 = vadd.f32 %v73, %v166
    %v168 = vpop.f32.mrf.mxu0
    %169 = vdwg.mxu0
    %v170 = vpack.c.bf16 %v167, %v164
    %v171 = vld [vmem:[#allocation5] sm:$0xf]
    %v172 = vld [vmem:[#allocation5 + $0x4] sm:$0xf]
    %v173 = vld [vmem:[#allocation5 + $0x8] sm:$0xf]
    %v174 = vld [vmem:[#allocation5 + $0xc] sm:$0xf]
    %v175 = vld [vmem:[#allocation5 + $0x10] sm:$0xf]
    %v176 = vld [vmem:[#allocation5 + $0x14] sm:$0xf]
    %v177 = vld [vmem:[#allocation5 + $0x18] sm:$0xf]
    %v178 = vld [vmem:[#allocation5 + $0x1c] sm:$0xf]
    %v179 = vld [vmem:[#allocation5 + $0x20] sm:$0xf]
    %v180 = vld [vmem:[#allocation5 + $0x24] sm:$0xf]
    %v181 = vld [vmem:[#allocation5 + $0x28] sm:$0xf]
    %v182 = vld [vmem:[#allocation5 + $0x2c] sm:$0xf]
    %v183 = vld [vmem:[#allocation5 + $0x30] sm:$0xf]
    %v184 = vld [vmem:[#allocation5 + $0x34] sm:$0xf]
    %v185 = vld [vmem:[#allocation5 + $0x38] sm:$0xf]
    %v186 = vld [vmem:[#allocation5 + $0x3c] sm:$0xf]
    %v187 = vld [vmem:[%s4] sm:$0x1]
    %v189 = vlaneseq
    %v190 = vshrl.u32 %v189, 7
    %v191 = vsub.s32 0, %v190
    %v192 = vrot.slane %v187, %v191
    %v210 = vunpack.c.l.b16 %v171
    %v211 = vunpack.c.l.b16 %v172
    %v212 = vunpack.c.l.b16 %v173
    %v213 = vunpack.c.l.b16 %v174
    %v214 = vunpack.c.l.b16 %v175
    %v215 = vunpack.c.l.b16 %v176
    %v216 = vunpack.c.l.b16 %v177
    %v217 = vunpack.c.l.b16 %v178
    %v218 = vunpack.c.l.b16 %v179
    %v219 = vunpack.c.l.b16 %v180
    %v220 = vunpack.c.l.b16 %v181
    %v221 = vunpack.c.l.b16 %v182
    %v222 = vunpack.c.l.b16 %v183
    %v223 = vunpack.c.l.b16 %v184
    %v224 = vunpack.c.l.b16 %v185
    %v225 = vunpack.c.l.b16 %v186
    %v226 = vpack.c.b16 %v211, %v210
    %v227 = vpack.c.b16 %v213, %v212
    %v228 = vpack.c.b16 %v215, %v214
    %v229 = vpack.c.b16 %v217, %v216
    %v230 = vpack.c.b16 %v219, %v218
    %v231 = vpack.c.b16 %v221, %v220
    %v232 = vpack.c.b16 %v223, %v222
    %v233 = vpack.c.b16 %v225, %v224
    %242 = vmatprep.subr.bf16.mxu0 0
    %243 = vmatpush1.bf16.msra.mxu0 %v233
    %244 = vmatprep.subr.bf16.mxu0 0
    %245 = vmatpush1.bf16.msra.mxu0 %v232
    %246 = vmatprep.subr.bf16.mxu0 0
    %247 = vmatpush1.bf16.msra.mxu0 %v231
    %248 = vmatprep.subr.bf16.mxu0 0
    %249 = vmatpush1.bf16.msra.mxu0 %v230
    %250 = vmatprep.subr.bf16.mxu0 0
    %251 = vmatpush1.bf16.msra.mxu0 %v229
    %252 = vmatprep.subr.bf16.mxu0 0
    %253 = vmatpush1.bf16.msra.mxu0 %v228
    %254 = vmatprep.subr.bf16.mxu0 0
    %255 = vmatpush1.bf16.msra.mxu0 %v227
    %256 = vmatprep.subr.bf16.mxu0 0
    %257 = vmatpush1.bf16.msra.mxu0 %v226
    %258 = vmatprep.subr.bf16.mxu0 0
    %259 = vmatpush2.bf16.msra.mxu0 0
    %260 = vmatprep.subr.bf16.mxu0 0
    %261 = vmatpush2.bf16.msra.mxu0 0
    %262 = vmatprep.subr.bf16.mxu0 0
    %263 = vmatpush2.bf16.msra.mxu0 0
    %264 = vmatprep.subr.bf16.mxu0 0
    %265 = vmatpush2.bf16.msra.mxu0 0
    %266 = vmatprep.subr.bf16.mxu0 0
    %267 = vmatpush2.bf16.msra.mxu0 0
    %268 = vmatprep.subr.bf16.mxu0 0
    %269 = vmatpush2.bf16.msra.mxu0 0
    %270 = vmatprep.subr.bf16.mxu0 0
    %271 = vmatpush2.bf16.msra.mxu0 0
    %272 = vmatprep.subr.bf16.mxu0 0
    %273 = vmatpush2.bf16.msra.mxu0 0
    %274 = vmatprep.mubr.bf16.mxu0 0
    %275 = vmatmul.mubr.bf16.gmra.mxu0 %v170
    %v276 = vpop.f32.mrf.mxu0
    %v277 = vadd.f32 %v192, %v276
    %v278 = vpop.f32.mrf.mxu0
    %v279 = vpop.f32.mrf.mxu0
    %v280 = vadd.f32 %v192, %v279
    %v281 = vpop.f32.mrf.mxu0
    %282 = vdwg.mxu0
    %283 = vst [vmem:[#allocation7] sm:$0xff] %v277
    %284 = vst [vmem:[#allocation7 + $0x8] sm:$0xff] %v280
    // Predicated region
    $region30: #{_forward_impl.1} parent=1 // pred_check
      _
    $region31: #{_forward_impl.1} parent=1 // pred_check_branch
      %286 = sbr.rel (0) target = $region33
    $region32: #{_forward_impl.1} parent=1 // pred_region
      %s288 = ssub.s32 256, 256
      %289 = vsyncadd [#allocation4], %s288
      %s290 = sshll.u32 [#allocation7], 4
      %s291 = int_to_ptr.vmem [resolvable:$true] %s290
      %296 = dma.vmem_to_hbm [thread:$0]  %s291, 256, %s5, [#allocation4], 128, 128, 8
    $region33: #{_forward_impl.1} parent=1 // pred_fallthru
      _
    // Predicated region
    $region34: #{_forward_impl.1} parent=1 // pred_check
      _
    $region35: #{_forward_impl.1} parent=1 // pred_check_branch
      %298 = sbr.rel (0) target = $region37
    $region36: #{_forward_impl.1} parent=1 // pred_region
      %299 = dma.done [#allocation4], 256
    $region37: #{_forward_impl.1} parent=1 // pred_fallthru
      _
    %300 = vsyncpa [#allocation3], 1
    %301 = vsyncpa [#allocation6], 1
    %302 = vsyncpa [#allocation4], 1

</llo_original>
